<compile_context>
chip_gen: v6e
topology: v6e:2x2x1
jax: 0.10.0
libtpu: 0.0.40
codegen_flags: <defaults>
</compile_context>

<pallas_src>
import functools

import jax
import jax.numpy as jnp
from jax.experimental import pallas as pl
from jax.experimental.pallas import tpu as pltpu


def _round_up(x, m):
    return ((x + m - 1) // m) * m


def _vmem_capacity_bytes():
    """Physical VMEM per TensorCore; conservative fallback if query fails."""
    try:
        info = pltpu.get_tpu_info()
        cap = getattr(info, "vmem_capacity_bytes", None)
        if cap:
            return int(cap)
    except Exception:
        pass
    return 64 * 1024 * 1024  # v7x per-TC size (smallest current generation)


# ----------------------------- kernels --------------------------------------


def ffn_kernel_resident(x_ref, wi_ref, wo_ref, o_ref, *, hid_blk):
    # x_ref : (tm, C_pad)
    # wi_ref: (C_pad, 2*hid_blk)  fused [Wi1 | Wi2], resident in VMEM
    # wo_ref: (hid_blk, C_pad)    resident in VMEM
    # o_ref : (tm, C_pad)
    x = x_ref[...]
    h = jnp.dot(x, wi_ref[...], preferred_element_type=jnp.float32)
    h1 = h[:, :hid_blk]          # static, lane-aligned slices (hid_blk % 128 == 0)
    h2 = h[:, hid_blk:]
    g = h1 * (h2 * jax.nn.sigmoid(h2))                     # x1 * silu(x2), f32
    o_ref[...] = jnp.dot(g.astype(wo_ref.dtype), wo_ref[...],
                         preferred_element_type=jnp.float32).astype(o_ref.dtype)


def ffn_kernel_streamed(x_ref, wi_ref, wo_ref, o_ref, acc_ref, *, hid_blk):
    # Blocked reduction over the hidden dim (grid axis 1, "arbitrary").
    # acc_ref: (tm, C_pad) f32, resident across the hid axis.
    k = pl.program_id(1)

    @pl.when(k == 0)
    def _():
        acc_ref[...] = jnp.zeros_like(acc_ref)

    x = x_ref[...]
    h = jnp.dot(x, wi_ref[...], preferred_element_type=jnp.float32)
    h1 = h[:, :hid_blk]
    h2 = h[:, hid_blk:]
    g = h1 * (h2 * jax.nn.sigmoid(h2))
    acc_ref[...] += jnp.dot(g.astype(wo_ref.dtype), wo_ref[...],
                            preferred_element_type=jnp.float32)

    @pl.when(k == pl.num_programs(1) - 1)
    def _():
        o_ref[...] = acc_ref[...].astype(o_ref.dtype)


# ----------------------------- wrapper --------------------------------------


def ffn_pallas(x_nchw, wi_conv, wo_conv, *, compute_dtype=jnp.bfloat16):
    """x_nchw: [B, C, H, W]; wi_conv: [2*hid, C, 1, 1]; wo_conv: [C, hid, 1, 1]."""
    B, C, H, W = x_nchw.shape
    hid = wo_conv.shape[1]
    out_dtype = x_nchw.dtype

    bpe = jnp.dtype(compute_dtype).itemsize
    out_bpe = jnp.dtype(out_dtype).itemsize

    # --- generation-aware VMEM budget -------------------------------------
    vmem_cap = _vmem_capacity_bytes()
    budget = min(int(vmem_cap * 0.8), vmem_cap - 8 * 1024 * 1024)
    tm_default = 1024 if vmem_cap >= 100 * 1024 * 1024 else 512

    # --- lane-dense channel padding ----------------------------------------
    C_pad = _round_up(C, 128)
    hid_pad_res = _round_up(hid, 128)

    # --- token tiling -------------------------------------------------------
    N = B * H * W
    align = 16 if bpe < 4 else 8        # bf16 packs 16 sublanes per vreg
    if N >= 2 * tm_default:
        tm = tm_default
    else:
        # Small N: split into >= 2 sublane-aligned tiles so the "parallel"
        # token axis can be sharded across both TensorCores on v7x.
        tm = max(align, _round_up(-(-N // 2), align))
    n_pad = (-N) % tm

    # --- VMEM working-set models (weights conservatively counted x2) -------
    def ws_resident(tm_, hidp_):
        return (2 * tm_ * C_pad * bpe            # x tile (double buffered)
                + 2 * 3 * C_pad * hidp_ * bpe    # [Wi1|Wi2] + Wo
                + 2 * tm_ * C_pad * out_bpe)     # y tile

    def ws_streamed(tm_, hb_):
        return (2 * tm_ * C_pad * bpe
                + 2 * 3 * C_pad * hb_ * bpe
                + 2 * tm_ * C_pad * out_bpe
                + tm_ * C_pad * 4)               # f32 accumulator

    resident = ws_resident(tm, hid_pad_res) <= budget
    if resident:
        hid_blk = hid_pad_res
        hid_pad = hid_pad_res
        working_set = ws_resident(tm, hid_blk)
    else:
        # Derive streamed tile sizes from the budget (never clamp afterwards).
        chosen = None
        for tm_c in sorted({tm, 512, 256, 128}, reverse=True):
            if tm_c > tm:
                continue
            for hb in (1024, 512, 256, 128):
                if hb > hid_pad_res:
                    continue
                if ws_streamed(tm_c, hb) <= budget:
                    chosen = (tm_c, hb)
                    break
            if chosen is not None:
                break
        if chosen is None:
            chosen = (128, 128)          # last resort; tiny tiles
        tm, hid_blk = chosen
        n_pad = (-N) % tm
        hid_pad = _round_up(hid, hid_blk)
        working_set = ws_streamed(tm, hid_blk)

    # --- weights: conv (out, in, 1, 1) -> matmul form, padded & fused ------
    wi = wi_conv[:, :, 0, 0]                              # (2*hid, C)
    wi1 = wi[:hid].T.astype(compute_dtype)                # (C, hid)
    wi2 = wi[hid:].T.astype(compute_dtype)                # (C, hid)
    wo = wo_conv[:, :, 0, 0].T.astype(compute_dtype)      # (hid, C)

    wi1 = jnp.pad(wi1, ((0, C_pad - C), (0, hid_pad - hid)))
    wi2 = jnp.pad(wi2, ((0, C_pad - C), (0, hid_pad - hid)))
    wo = jnp.pad(wo, ((0, hid_pad - hid), (0, C_pad - C)))

    n_k = hid_pad // hid_blk
    # Blockwise fusion: hidden-block k of the fused weight holds
    # [Wi1[:, k*hb:(k+1)*hb] | Wi2[:, k*hb:(k+1)*hb]] -> one DMA stream and
    # one MXU pass per step; the gate split in-kernel is lane-aligned.
    wi_fused = jnp.concatenate(
        [wi1.reshape(C_pad, n_k, hid_blk), wi2.reshape(C_pad, n_k, hid_blk)],
        axis=2).reshape(C_pad, n_k * 2 * hid_blk)

    # --- activations: NCHW -> NHWC -> [N, C_pad] ----------------------------
    # TODO(synk): these two full-HBM-pass relayouts (NCHW<->NHWC) disappear if
    # the caller supplies/consumes channels-last activations directly.
    x_flat = jnp.transpose(x_nchw, (0, 2, 3, 1)).reshape(N, C)
    x_flat = x_flat.astype(compute_dtype)
    x_flat = jnp.pad(x_flat, ((0, n_pad), (0, C_pad - C)))
    n_tok = N + n_pad
    n_i = n_tok // tm

    vmem_limit = int(min(budget, max(int(working_set * 1.25),
                                     32 * 1024 * 1024)))

    weight_bytes = 3 * C_pad * hid_pad * bpe
    if not resident:
        weight_bytes *= n_i                 # Wi/Wo re-streamed per token tile
    cost = pl.CostEstimate(
        flops=int(6 * N * C * hid),         # 2 up-proj matmuls + 1 down-proj
        transcendentals=int(N * hid),       # sigmoid in silu
        bytes_accessed=int(n_tok * C_pad * bpe + weight_bytes
                           + n_tok * C_pad * out_bpe),
    )

    if resident:
        kernel = functools.partial(ffn_kernel_resident, hid_blk=hid_blk)
        grid = (n_i,)
        in_specs = [
            pl.BlockSpec((tm, C_pad), lambda i: (i, 0)),            # x tile
            pl.BlockSpec((C_pad, 2 * hid_blk), lambda i: (0, 0)),   # [Wi1|Wi2]
            pl.BlockSpec((hid_blk, C_pad), lambda i: (0, 0)),       # Wo
        ]
        out_specs = pl.BlockSpec((tm, C_pad), lambda i: (i, 0))
        scratch_shapes = []
        dims = ("parallel",)
    else:
        kernel = functools.partial(ffn_kernel_streamed, hid_blk=hid_blk)
        grid = (n_i, n_k)
        in_specs = [
            pl.BlockSpec((tm, C_pad), lambda i, k: (i, 0)),
            pl.BlockSpec((C_pad, 2 * hid_blk), lambda i, k: (0, k)),
            pl.BlockSpec((hid_blk, C_pad), lambda i, k: (k, 0)),
        ]
        out_specs = pl.BlockSpec((tm, C_pad), lambda i, k: (i, 0))
        scratch_shapes = [pltpu.VMEM((tm, C_pad), jnp.float32)]
        dims = ("parallel", "arbitrary")

    out_flat = pl.pallas_call(
        kernel,
        out_shape=jax.ShapeDtypeStruct((n_tok, C_pad), out_dtype),
        grid_spec=pltpu.PrefetchScalarGridSpec(
            num_scalar_prefetch=0,
            grid=grid,
            in_specs=in_specs,
            out_specs=out_specs,
            scratch_shapes=scratch_shapes,
        ),
        compiler_params=pltpu.CompilerParams(
            dimension_semantics=dims,
            vmem_limit_bytes=vmem_limit,
        ),
        cost_estimate=cost,
    )(x_flat, wi_fused, wo)

    out_flat = out_flat[:N, :C]
    # [N, C] -> NHWC -> NCHW
    return jnp.transpose(out_flat.reshape(B, H, W, C), (0, 3, 1, 2))


# ----------------------------- reference ------------------------------------


def ffn_reference(x_nchw, wi_conv, wo_conv):
    """Pure-JAX reference mirroring the PyTorch forward (f32)."""
    hid = wo_conv.shape[1]
    wi = wi_conv[:, :, 0, 0]            # (2*hid, C)
    wo = wo_conv[:, :, 0, 0]            # (C, hid)
    h = jnp.einsum("bchw,oc->bohw", x_nchw, wi)
    x1, x2 = h[:, :hid], h[:, hid:]
    g = x1 * (x2 * jax.nn.sigmoid(x2))
    return jnp.einsum("bchw,oc->bohw", g, wo)


if __name__ == "__main__":
    B, dim, H, W, s = 2, 4, 16, 16, 2

    key = jax.random.PRNGKey(0)
    kx, kwi, kwo = jax.random.split(key, 3)

    x = jax.random.normal(kx, (B, dim, H, W), dtype=jnp.float32)
    # Deterministic synthetic weights matching nn.Conv2d shapes (out, in, 1, 1).
    wi_conv = jax.random.normal(kwi, (dim * s * 2, dim, 1, 1), dtype=jnp.float32) * 0.1
    wo_conv = jax.random.normal(kwo, (dim, dim * s, 1, 1), dtype=jnp.float32) * 0.1

    y_ref = ffn_reference(x, wi_conv, wo_conv)

    # f32 compute path: matches the PyTorch-semantics reference tightly.
    y_f32 = jax.block_until_ready(
        ffn_pallas(x, wi_conv, wo_conv, compute_dtype=jnp.float32))
    assert y_f32.shape == (B, dim, H, W)
    assert jnp.allclose(y_f32, y_ref, atol=1e-4, rtol=1e-4)

    # Default fast path (bf16 matmul operands, f32 accumulation): loose tol.
    y_bf16 = jax.block_until_ready(ffn_pallas(x, wi_conv, wo_conv))
    assert y_bf16.shape == (B, dim, H, W)
    assert jnp.allclose(y_bf16, y_ref, atol=3e-2, rtol=3e-2)

    # Uneven token count exercises the wrapper padding path (N = 70).
    x2 = jax.random.normal(kx, (1, dim, 10, 7), dtype=jnp.float32)
    y2 = jax.block_until_ready(
        ffn_pallas(x2, wi_conv, wo_conv, compute_dtype=jnp.float32))
    y2_ref = ffn_reference(x2, wi_conv, wo_conv)
    assert y2.shape == (1, dim, 10, 7)
    assert jnp.allclose(y2, y2_ref, atol=1e-4, rtol=1e-4)

    print("KERNEL_OK")
</pallas_src>

<mosaic_0001>
module attributes {stable_mosaic.version = 11 : i64} {
  func.func @ffn_kernel_resident(%arg0: i32, %arg1: memref<256x128xf32, #tpu.memory_space<vmem>>, %arg2: memref<128x256xf32, #tpu.memory_space<vmem>>, %arg3: memref<128x128xf32, #tpu.memory_space<vmem>>, %arg4: memref<256x128xf32, #tpu.memory_space<vmem>>) attributes {dimension_semantics = [#tpu.dimension_semantics<parallel>], iteration_bounds = array<i64: 2>, scalar_prefetch = 0 : i64, scratch_operands = 0 : i64, tpu.core_type = #tpu.core_type<tc>, window_params = [{transform_indices = @transform_0, window_bounds = array<i64: 256, 128>}, {pipeline_mode = #tpu.pipeline_mode<synchronous>, transform_indices = @transform_1, window_bounds = array<i64: 128, 256>}, {pipeline_mode = #tpu.pipeline_mode<synchronous>, transform_indices = @transform_2, window_bounds = array<i64: 128, 128>}, {transform_indices = @transform_3, window_bounds = array<i64: 256, 128>}]} {
    %c0 = arith.constant 0 : index
    %c0_0 = arith.constant 0 : index
    %0 = vector.load %arg1[%c0, %c0_0] : memref<256x128xf32, #tpu.memory_space<vmem>>, vector<256x128xf32>
    %c0_1 = arith.constant 0 : index
    %c0_2 = arith.constant 0 : index
    %1 = vector.load %arg2[%c0_1, %c0_2] : memref<128x256xf32, #tpu.memory_space<vmem>>, vector<128x256xf32>
    %cst = arith.constant dense<0.000000e+00> : vector<256x256xf32>
    %2 = tpu.matmul %0, %1, %cst {dimension_numbers = #tpu.dot_dimension_numbers<[1], [0], [0], [1], [0, 0, 1, 1], [], []>} : vector<256x128xf32>, vector<128x256xf32>, vector<256x256xf32> -> vector<256x256xf32>
    %3 = vector.extract_strided_slice %2 {offsets = [0, 0], sizes = [256, 128], strides = [1, 1]} : vector<256x256xf32> to vector<256x128xf32>
    %4 = vector.extract_strided_slice %2 {offsets = [0, 128], sizes = [256, 128], strides = [1, 1]} : vector<256x256xf32> to vector<256x128xf32>
    %5 = arith.negf %4 : vector<256x128xf32>
    %6 = math.exp %5 : vector<256x128xf32>
    %cst_3 = arith.constant 1.000000e+00 : f32
    %7 = vector.broadcast %cst_3 : f32 to vector<256x128xf32>
    %8 = arith.addf %7, %6 : vector<256x128xf32>
    %9 = arith.divf %7, %8 : vector<256x128xf32>
    %10 = arith.mulf %4, %9 : vector<256x128xf32>
    %11 = arith.mulf %3, %10 : vector<256x128xf32>
    %c0_4 = arith.constant 0 : index
    %c0_5 = arith.constant 0 : index
    %12 = vector.load %arg3[%c0_4, %c0_5] : memref<128x128xf32, #tpu.memory_space<vmem>>, vector<128x128xf32>
    %cst_6 = arith.constant dense<0.000000e+00> : vector<256x128xf32>
    %13 = tpu.matmul %11, %12, %cst_6 {dimension_numbers = #tpu.dot_dimension_numbers<[1], [0], [0], [1], [0, 0, 1, 1], [], []>} : vector<256x128xf32>, vector<128x128xf32>, vector<256x128xf32> -> vector<256x128xf32>
    %c0_7 = arith.constant 0 : index
    %c0_8 = arith.constant 0 : index
    %14 = vector.load %arg4[%c0_7, %c0_8] : memref<256x128xf32, #tpu.memory_space<vmem>>, vector<256x128xf32>
    tpu.vector_store %arg4[%c0_7, %c0_8], %13 {strides = array<i32>} : memref<256x128xf32, #tpu.memory_space<vmem>>, vector<256x128xf32>,
    return
  }
  func.func @transform_0(%arg0: i32) -> (i32, i32) {
    %c0_i32 = arith.constant 0 : i32
    %c0_i32_0 = arith.constant 0 : i32
    return %arg0, %c0_i32 : i32, i32
  }
  func.func @transform_1(%arg0: i32) -> (i32, i32) {
    %c0_i32 = arith.constant 0 : i32
    %c0_i32_0 = arith.constant 0 : i32
    %c0_i32_1 = arith.constant 0 : i32
    return %c0_i32, %c0_i32_0 : i32, i32
  }
  func.func @transform_2(%arg0: i32) -> (i32, i32) {
    %c0_i32 = arith.constant 0 : i32
    %c0_i32_0 = arith.constant 0 : i32
    %c0_i32_1 = arith.constant 0 : i32
    return %c0_i32, %c0_i32_0 : i32, i32
  }
  func.func @transform_3(%arg0: i32) -> (i32, i32) {
    %c0_i32 = arith.constant 0 : i32
    %c0_i32_0 = arith.constant 0 : i32
    return %arg0, %c0_i32 : i32, i32
  }
}

</mosaic_0001>

<llo_original>
// kernel: tpu_custom_call.1
$region0: #{tpu_custom_call.1}
  #allocation0 [shape = 'u32[]', space=smem, size = 0x4, offset = 0x4, fixed_abs, tag = 'smem constant byte address 0x4 - core index']
  #allocation1 [shape = 'u32[144,128]{1,0:T(1,128)}', space=vmem, size = 0x12000, scoped, tag = 'internal scratch']
  %s0 = inlined_call_operand.hbm [shape: f32[512,128], index: 0, kind: input, shape index: {}]
  %s1 = inlined_call_operand.hbm [shape: f32[128,256], index: 1, kind: input, shape index: {}]
  %s2 = inlined_call_operand.hbm [shape: f32[128,128], index: 2, kind: input, shape index: {}]
  %s3 = inlined_call_operand.hbm [shape: f32[512,128], index: 3, kind: output, shape index: {}]
  %s4 = sld [smem:[#allocation0]]
  $region57: #{tpu_custom_call.1} parent=0
    _
  %s6 = ssub.s32 1, %s4
  %s7 = scalar_select 0, %s6, %s4
  $region1: #{tpu_custom_call.1} parent=0
    #allocation2 [shape = 'u8[262144]{0}', space=vmem, size = 0x40000, scoped, tag = 'input window, operand 0']
    #allocation3 [shape = 's32[2]{0}', space=sflag, size = 0x8, scoped, tag = 'scoped memory for tpu_custom_call.1']
    #allocation4 [shape = 's32[2]{0}', space=sflag, size = 0x8, scoped, tag = 'scoped memory for tpu_custom_call.1']
    #allocation5 [shape = 'u8[131072]{0}', space=vmem, size = 0x20000, scoped, tag = 'input window, operand 1, single buffered']
    #allocation6 [shape = 's32[1]{0}', space=sflag, size = 0x4, scoped, tag = 'scoped memory for tpu_custom_call.1']
    #allocation7 [shape = 'u8[65536]{0}', space=vmem, size = 0x10000, scoped, tag = 'input window, operand 2, single buffered']
    #allocation8 [shape = 'u8[262144]{0}', space=vmem, size = 0x40000, scoped, tag = 'output window, operand 0']
    %8 = vsyncpa [#allocation3], 0
    %s9 = scalar_lea.sflag [#allocation3], 1
    %10 = vsyncpa %s9, 0
    %11 = vsyncpa [#allocation6], 0
    %12 = vsyncpa [#allocation4], 0
    %s13 = scalar_lea.sflag [#allocation4], 1
    %14 = vsyncpa %s13, 0
    loop: start=0, step=1, limit=4
    $region2: #{tpu_custom_call.1} parent=1 // loop_pre_header
      _
    $region3: #{tpu_custom_call.1} parent=1 // loop_header
      %s16 = sphi 0, %s20
      %p17 = scmp.ge.s32.totalorder %s16, 4
      %s26 = sphi 0, %s28
      %s29 = sphi 0, %s26
      %s30 = sphi 0, %s29
      %s46 = sphi 0, %s30
      %s50 = sphi 0, %s50
      %s52 = sphi 0, %s50
      %s53 = sphi 0, %s52
      %s67 = sphi 0, %s53
      %s71 = sphi 0, %s71
      %s73 = sphi 0, %s71
      %s74 = sphi 0, %s73
      %s88 = sphi 0, %s74
      %s94 = sphi 0, %s96
      %s97 = sphi 0, %s94
      %s98 = sphi 0, %s97
      %s114 = sphi 0, %s98
    $region4: #{tpu_custom_call.1} parent=1 // loop_header_branch
      %19 = sbr.rel (%p17) target = $region8
    $region5: #{tpu_custom_call.1} parent=1 // loop_body
      %s21 = ssub.s32 %s16, 1
      %s22 = ssub.s32 %s16, 2
      %s23 = sadd.s32 %s16, 1
      %s24 = ssub.s32 %s16, %s23
      %p25 = scmp.eq.s32.totalorder %s24, 0
      %s27 = sadd.s32 %s26, 1
      %s28 = scalar_select %p25, %s26, %s27
      %p31 = pneg %p25
      %p32 = scmp.eq.s32.totalorder %s16, 1
      %p33 = por %p31, %p32
      %p34 = scmp.ne.s32.totalorder %s26, %s29
      %p35 = scmp.eq.s32.totalorder %s16, 0
      %p36 = por %p34, %p35
      %p37 = scmp.ne.s32.totalorder %s26, %s29
      %p38 = scmp.eq.s32.totalorder %s21, 1
      %p39 = por %p37, %p38
      %p40 = scmp.ne.s32.totalorder %s29, %s30
      %p41 = scmp.eq.s32.totalorder %s21, 0
      %p42 = por %p40, %p41
      %p43 = scmp.ne.s32.totalorder %s29, %s30
      %p44 = scmp.eq.s32.totalorder %s22, 1
      %p45 = por %p43, %p44
      %p47 = scmp.ne.s32.totalorder %s30, %s46
      %p48 = scmp.eq.s32.totalorder %s22, 0
      %p49 = por %p47, %p48
      %s51 = sadd.s32 %s50, 1
      %p54 = scmp.eq.s32.totalorder %s16, 1
      %p55 = scmp.ne.s32.totalorder %s50, %s52
      %p56 = scmp.eq.s32.totalorder %s16, 0
      %p57 = por %p55, %p56
      %p58 = scmp.ne.s32.totalorder %s50, %s52
      %p59 = scmp.eq.s32.totalorder %s21, 1
      %p60 = por %p58, %p59
      %p61 = scmp.ne.s32.totalorder %s52, %s53
      %p62 = scmp.eq.s32.totalorder %s21, 0
      %p63 = por %p61, %p62
      %p64 = scmp.ne.s32.totalorder %s52, %s53
      %p65 = scmp.eq.s32.totalorder %s22, 1
      %p66 = por %p64, %p65
      %p68 = scmp.ne.s32.totalorder %s53, %s67
      %p69 = scmp.eq.s32.totalorder %s22, 0
      %p70 = por %p68, %p69
      %s72 = sadd.s32 %s71, 1
      %p75 = scmp.eq.s32.totalorder %s16, 1
      %p76 = scmp.ne.s32.totalorder %s71, %s73
      %p77 = scmp.eq.s32.totalorder %s16, 0
      %p78 = por %p76, %p77
      %p79 = scmp.ne.s32.totalorder %s71, %s73
      %p80 = scmp.eq.s32.totalorder %s21, 1
      %p81 = por %p79, %p80
      %p82 = scmp.ne.s32.totalorder %s73, %s74
      %p83 = scmp.eq.s32.totalorder %s21, 0
      %p84 = por %p82, %p83
      %p85 = scmp.ne.s32.totalorder %s73, %s74
      %p86 = scmp.eq.s32.totalorder %s22, 1
      %p87 = por %p85, %p86
      %p89 = scmp.ne.s32.totalorder %s74, %s88
      %p90 = scmp.eq.s32.totalorder %s22, 0
      %p91 = por %p89, %p90
      %s92 = ssub.s32 %s16, %s23
      %p93 = scmp.eq.s32.totalorder %s92, 0
      %s95 = sadd.s32 %s94, 1
      %s96 = scalar_select %p93, %s94, %s95
      %p99 = pneg %p93
      %p100 = scmp.eq.s32.totalorder %s16, 1
      %p101 = por %p99, %p100
      %p102 = scmp.ne.s32.totalorder %s94, %s97
      %p103 = scmp.eq.s32.totalorder %s16, 0
      %p104 = por %p102, %p103
      %p105 = scmp.ne.s32.totalorder %s94, %s97
      %p106 = scmp.eq.s32.totalorder %s21, 1
      %p107 = por %p105, %p106
      %p108 = scmp.ne.s32.totalorder %s97, %s98
      %p109 = scmp.eq.s32.totalorder %s21, 0
      %p110 = por %p108, %p109
      %p111 = scmp.ne.s32.totalorder %s97, %s98
      %p112 = scmp.eq.s32.totalorder %s22, 1
      %p113 = por %p111, %p112
      %p115 = scmp.ne.s32.totalorder %s98, %s114
      %p116 = scmp.eq.s32.totalorder %s22, 0
      %p117 = por %p115, %p116
      %p118 = scmp.le.s32.totalorder 1, %s16
      %p119 = scmp.lt.s32.totalorder %s16, 3
      %p120 = pnand %p118, %p119
      %p121 = pneg %p120
      // Predicated region
      $region9: #{tpu_custom_call.1} parent=5 // pred_check
        _
      $region10: #{tpu_custom_call.1} parent=5 // pred_check_branch
        %123 = sbr.rel (%p120) target = $region12
      $region11: #{tpu_custom_call.1} parent=5 // pred_region
        %s124 = ssub.s32 %s16, 1
        // Predicated region
        $region13: #{tpu_custom_call.1} parent=11 // pred_check
          %p125 = pneg %p63
        $region14: #{tpu_custom_call.1} parent=11 // pred_check_branch
          %127 = sbr.rel (%p125) target = $region16
        $region15: #{tpu_custom_call.1} parent=11 // pred_region
          %s129 = ssub.s32 4096, 4096
          %130 = vsyncadd [#allocation6], %s129
          %s131 = sshll.u32 [#allocation5], 4
          %s132 = int_to_ptr.vmem [resolvable:$true] %s131
          %137 = dma.hbm_to_vmem [thread:$0]  %s1, 4096, %s132, [#allocation6], 256, 256, 16
        $region16: #{tpu_custom_call.1} parent=11 // pred_fallthru
          _
        // Predicated region
        $region17: #{tpu_custom_call.1} parent=11 // pred_check
          %p138 = pneg %p84
        $region18: #{tpu_custom_call.1} parent=11 // pred_check_branch
          %140 = sbr.rel (%p138) target = $region20
        $region19: #{tpu_custom_call.1} parent=11 // pred_region
          %s142 = ssub.s32 2048, 2048
          %143 = vsyncadd [#allocation6], %s142
          %s144 = sshll.u32 [#allocation7], 4
          %s145 = int_to_ptr.vmem [resolvable:$true] %s144
          %150 = dma.hbm_to_vmem [thread:$0]  %s2, 2048, %s145, [#allocation6], 128, 128, 8
        $region20: #{tpu_custom_call.1} parent=11 // pred_fallthru
          _
      $region12: #{tpu_custom_call.1} parent=5 // pred_fallthru
        _
      %p151 = scmp.lt.s32.totalorder %s16, 2
      // Predicated region
      $region21: #{tpu_custom_call.1} parent=5 // pred_check
        %p152 = pneg %p151
      $region22: #{tpu_custom_call.1} parent=5 // pred_check_branch
        %154 = sbr.rel (%p152) target = $region24
      $region23: #{tpu_custom_call.1} parent=5 // pred_region
        // Predicated region
        $region25: #{tpu_custom_call.1} parent=23 // pred_check
          %p155 = pneg %p36
        $region26: #{tpu_custom_call.1} parent=23 // pred_check_branch
          %157 = sbr.rel (%p155) target = $region28
        $region27: #{tpu_custom_call.1} parent=23 // pred_region
          %s158 = sand.u32 %s26, 1
          %s159 = scalar_lea.sflag [#allocation3], %s158
          %s160 = sand.u32 %s26, 1
          %s161 = smul.addr %s160, 256
          %s162 = scalar_lea.vmem [#allocation2], %s161
          %s163 = smul.u32 32, %s16
          %s165 = ssub.s32 4096, 4096
          %166 = vsyncadd %s159, %s165
          %s167 = smul.addr %s163, 128
          %s168 = scalar_lea.hbm %s0, %s167
          %s169 = sshll.u32 %s162, 4
          %s170 = int_to_ptr.vmem [resolvable:$true] %s169
          %175 = dma.hbm_to_vmem [thread:$0]  %s168, 4096, %s170, %s159, 128, 128, 8
        $region28: #{tpu_custom_call.1} parent=23 // pred_fallthru
          _
      $region24: #{tpu_custom_call.1} parent=5 // pred_fallthru
        _
      %p176 = scmp.le.s32.totalorder 1, %s16
      %p177 = scmp.lt.s32.totalorder %s16, 3
      %p178 = pnand %p176, %p177
      %p179 = pneg %p178
      // Predicated region
      $region29: #{tpu_custom_call.1} parent=5 // pred_check
        _
      $region30: #{tpu_custom_call.1} parent=5 // pred_check_branch
        %181 = sbr.rel (%p178) target = $region32
      $region31: #{tpu_custom_call.1} parent=5 // pred_region
        %s182 = ssub.s32 %s16, 1
        %s183 = sand.u32 %s29, 1
        %s184 = scalar_lea.sflag [#allocation3], %s183
        %s185 = sand.u32 %s29, 1
        %s186 = smul.addr %s185, 256
        %s187 = scalar_lea.vmem [#allocation2], %s186
        // Predicated region
        $region33: #{tpu_custom_call.1} parent=31 // pred_check
          %p188 = pneg %p42
        $region34: #{tpu_custom_call.1} parent=31 // pred_check_branch
          %190 = sbr.rel (%p188) target = $region36
        $region35: #{tpu_custom_call.1} parent=31 // pred_region
          %191 = dma.done %s184, 4096
        $region36: #{tpu_custom_call.1} parent=31 // pred_fallthru
          _
        // Predicated region
        $region37: #{tpu_custom_call.1} parent=31 // pred_check
          %p192 = pneg %p63
        $region38: #{tpu_custom_call.1} parent=31 // pred_check_branch
          %194 = sbr.rel (%p192) target = $region40
        $region39: #{tpu_custom_call.1} parent=31 // pred_region
          %195 = dma.done [#allocation6], 4096
        $region40: #{tpu_custom_call.1} parent=31 // pred_fallthru
          _
        // Predicated region
        $region41: #{tpu_custom_call.1} parent=31 // pred_check
          %p196 = pneg %p84
        $region42: #{tpu_custom_call.1} parent=31 // pred_check_branch
          %198 = sbr.rel (%p196) target = $region44
        $region43: #{tpu_custom_call.1} parent=31 // pred_region
          %199 = dma.done [#allocation6], 2048
        $region44: #{tpu_custom_call.1} parent=31 // pred_fallthru
          _
        %s200 = sand.u32 %s29, 1
        %s201 = scalar_lea.sflag [#allocation3], %s200
        %s202 = sand.u32 %s29, 1
        %s203 = smul.addr %s202, 256
        %s204 = scalar_lea.vmem [#allocation2], %s203
        %p205 = pneg %p42
        %p206 = pneg %p39
        %p207 = pneg %p63
        %p208 = pneg %p60
        %p209 = pneg %p84
        %p210 = pneg %p81
        %p211 = pneg %p110
        %p212 = pneg %p107
        %s213 = sand.u32 %s97, 1
        %s214 = scalar_lea.sflag [#allocation4], %s213
        %s215 = sand.u32 %s97, 1
        %s216 = smul.addr %s215, 256
        %s217 = scalar_lea.vmem [#allocation8], %s216
        %s218 = smul.u32 32, %s21
        %s219 = smul.u32 32, %s21
        %v220 = vld [vmem:[%s187] sm:$0xff]
        %v221 = vld [vmem:[%s187 + $0x8] sm:$0xff]
        %v222 = vld [vmem:[%s187 + $0x10] sm:$0xff]
        %v223 = vld [vmem:[%s187 + $0x18] sm:$0xff]
        %v224 = vld [vmem:[%s187 + $0x20] sm:$0xff]
        %v225 = vld [vmem:[%s187 + $0x28] sm:$0xff]
        %v226 = vld [vmem:[%s187 + $0x30] sm:$0xff]
        %v227 = vld [vmem:[%s187 + $0x38] sm:$0xff]
        %v228 = vld [vmem:[%s187 + $0x40] sm:$0xff]
        %v229 = vld [vmem:[%s187 + $0x48] sm:$0xff]
        %v230 = vld [vmem:[%s187 + $0x50] sm:$0xff]
        %v231 = vld [vmem:[%s187 + $0x58] sm:$0xff]
        %v232 = vld [vmem:[%s187 + $0x60] sm:$0xff]
        %v233 = vld [vmem:[%s187 + $0x68] sm:$0xff]
        %v234 = vld [vmem:[%s187 + $0x70] sm:$0xff]
        %v235 = vld [vmem:[%s187 + $0x78] sm:$0xff]
        %v236 = vld [vmem:[%s187 + $0x80] sm:$0xff]
        %v237 = vld [vmem:[%s187 + $0x88] sm:$0xff]
        %v238 = vld [vmem:[%s187 + $0x90] sm:$0xff]
        %v239 = vld [vmem:[%s187 + $0x98] sm:$0xff]
        %v240 = vld [vmem:[%s187 + $0xa0] sm:$0xff]
        %v241 = vld [vmem:[%s187 + $0xa8] sm:$0xff]
        %v242 = vld [vmem:[%s187 + $0xb0] sm:$0xff]
        %v243 = vld [vmem:[%s187 + $0xb8] sm:$0xff]
        %v244 = vld [vmem:[%s187 + $0xc0] sm:$0xff]
        %v245 = vld [vmem:[%s187 + $0xc8] sm:$0xff]
        %v246 = vld [vmem:[%s187 + $0xd0] sm:$0xff]
        %v247 = vld [vmem:[%s187 + $0xd8] sm:$0xff]
        %v248 = vld [vmem:[%s187 + $0xe0] sm:$0xff]
        %v249 = vld [vmem:[%s187 + $0xe8] sm:$0xff]
        %v250 = vld [vmem:[%s187 + $0xf0] sm:$0xff]
        %v251 = vld [vmem:[%s187 + $0xf8] sm:$0xff]
        %v252 = vld [vmem:[#allocation5] sm:$0xff]
        %v253 = vld [vmem:[#allocation5 + $0x8] sm:$0xff]
        %v254 = vld [vmem:[#allocation5 + $0x10] sm:$0xff]
        %v255 = vld [vmem:[#allocation5 + $0x18] sm:$0xff]
        %v256 = vld [vmem:[#allocation5 + $0x20] sm:$0xff]
        %v257 = vld [vmem:[#allocation5 + $0x28] sm:$0xff]
        %v258 = vld [vmem:[#allocation5 + $0x30] sm:$0xff]
        %v259 = vld [vmem:[#allocation5 + $0x38] sm:$0xff]
        %v260 = vld [vmem:[#allocation5 + $0x40] sm:$0xff]
        %v261 = vld [vmem:[#allocation5 + $0x48] sm:$0xff]
        %v262 = vld [vmem:[#allocation5 + $0x50] sm:$0xff]
        %v263 = vld [vmem:[#allocation5 + $0x58] sm:$0xff]
        %v264 = vld [vmem:[#allocation5 + $0x60] sm:$0xff]
        %v265 = vld [vmem:[#allocation5 + $0x68] sm:$0xff]
        %v266 = vld [vmem:[#allocation5 + $0x70] sm:$0xff]
        %v267 = vld [vmem:[#allocation5 + $0x78] sm:$0xff]
        %v268 = vld [vmem:[#allocation5 + $0x80] sm:$0xff]
        %v269 = vld [vmem:[#allocation5 + $0x88] sm:$0xff]
        %v270 = vld [vmem:[#allocation5 + $0x90] sm:$0xff]
        %v271 = vld [vmem:[#allocation5 + $0x98] sm:$0xff]
        %v272 = vld [vmem:[#allocation5 + $0xa0] sm:$0xff]
        %v273 = vld [vmem:[#allocation5 + $0xa8] sm:$0xff]
        %v274 = vld [vmem:[#allocation5 + $0xb0] sm:$0xff]
        %v275 = vld [vmem:[#allocation5 + $0xb8] sm:$0xff]
        %v276 = vld [vmem:[#allocation5 + $0xc0] sm:$0xff]
        %v277 = vld [vmem:[#allocation5 + $0xc8] sm:$0xff]
        %v278 = vld [vmem:[#allocation5 + $0xd0] sm:$0xff]
        %v279 = vld [vmem:[#allocation5 + $0xd8] sm:$0xff]
        %v280 = vld [vmem:[#allocation5 + $0xe0] sm:$0xff]
        %v281 = vld [vmem:[#allocation5 + $0xe8] sm:$0xff]
        %v282 = vld [vmem:[#allocation5 + $0xf0] sm:$0xff]
        %v283 = vld [vmem:[#allocation5 + $0xf8] sm:$0xff]
        %284 = vmatprep.subr.mxu0 %v283
        %285 = vmatpush1.msra.mxu0 %v282
        %286 = vmatprep.subr.mxu0 %v281
        %287 = vmatpush1.msra.mxu0 %v280
        %288 = vmatprep.subr.mxu0 %v279
        %289 = vmatpush1.msra.mxu0 %v278
        %290 = vmatprep.subr.mxu0 %v277
        %291 = vmatpush1.msra.mxu0 %v276
        %292 = vmatprep.subr.mxu0 %v275
        %293 = vmatpush1.msra.mxu0 %v274
        %294 = vmatprep.subr.mxu0 %v273
        %295 = vmatpush1.msra.mxu0 %v272
        %296 = vmatprep.subr.mxu0 %v271
        %297 = vmatpush1.msra.mxu0 %v270
        %298 = vmatprep.subr.mxu0 %v269
        %299 = vmatpush1.msra.mxu0 %v268
        %300 = vmatprep.subr.mxu0 %v267
        %301 = vmatpush1.msra.mxu0 %v266
        %302 = vmatprep.subr.mxu0 %v265
        %303 = vmatpush1.msra.mxu0 %v264
        %304 = vmatprep.subr.mxu0 %v263
        %305 = vmatpush1.msra.mxu0 %v262
        %306 = vmatprep.subr.mxu0 %v261
        %307 = vmatpush1.msra.mxu0 %v260
        %308 = vmatprep.subr.mxu0 %v259
        %309 = vmatpush1.msra.mxu0 %v258
        %310 = vmatprep.subr.mxu0 %v257
        %311 = vmatpush1.msra.mxu0 %v256
        %312 = vmatprep.subr.mxu0 %v255
        %313 = vmatpush1.msra.mxu0 %v254
        %314 = vmatprep.subr.mxu0 %v253
        %315 = vmatpush1.msra.mxu0 %v252
        %316 = vmatprep.subr.mxu0 0.0
        %317 = vmatpush2.msra.mxu0 0.0
        %318 = vmatprep.subr.mxu0 0.0
        %319 = vmatpush2.msra.mxu0 0.0
        %320 = vmatprep.subr.mxu0 0.0
        %321 = vmatpush2.msra.mxu0 0.0
        %322 = vmatprep.subr.mxu0 0.0
        %323 = vmatpush2.msra.mxu0 0.0
        %324 = vmatprep.subr.mxu0 0.0
        %325 = vmatpush2.msra.mxu0 0.0
        %326 = vmatprep.subr.mxu0 0.0
        %327 = vmatpush2.msra.mxu0 0.0
        %328 = vmatprep.subr.mxu0 0.0
        %329 = vmatpush2.msra.mxu0 0.0
        %330 = vmatprep.subr.mxu0 0.0
        %331 = vmatpush2.msra.mxu0 0.0
        %332 = vmatprep.subr.mxu0 0.0
        %333 = vmatpush2.msra.mxu0 0.0
        %334 = vmatprep.subr.mxu0 0.0
        %335 = vmatpush2.msra.mxu0 0.0
        %336 = vmatprep.subr.mxu0 0.0
        %337 = vmatpush2.msra.mxu0 0.0
        %338 = vmatprep.subr.mxu0 0.0
        %339 = vmatpush2.msra.mxu0 0.0
        %340 = vmatprep.subr.mxu0 0.0
        %341 = vmatpush2.msra.mxu0 0.0
        %342 = vmatprep.subr.mxu0 0.0
        %343 = vmatpush2.msra.mxu0 0.0
        %344 = vmatprep.subr.mxu0 0.0
        %345 = vmatpush2.msra.mxu0 0.0
        %346 = vmatprep.subr.mxu0 0.0
        %347 = vmatpush2.msra.mxu0 0.0
        %348 = vmatprep.mubr.f32.mxu0 0.0
        %349 = vmatmul.mubr.f32.gmra.mxu0 %v220
        %v350 = vpop.f32.mrf.mxu0
        %v351 = vadd.f32 0.0, %v350
        %v352 = vpop.f32.mrf.mxu0
        %v353 = vadd.f32 0.0, %v352
        %354 = vmatprep.mubr.f32.mxu0 0.0
        %355 = vmatmul.mubr.f32.gmra.mxu0 %v221
        %v356 = vpop.f32.mrf.mxu0
        %v357 = vadd.f32 0.0, %v356
        %v358 = vpop.f32.mrf.mxu0
        %v359 = vadd.f32 0.0, %v358
        %360 = vmatprep.mubr.f32.mxu0 0.0
        %361 = vmatmul.mubr.f32.gmra.mxu0 %v222
        %v362 = vpop.f32.mrf.mxu0
        %v363 = vadd.f32 0.0, %v362
        %v364 = vpop.f32.mrf.mxu0
        %v365 = vadd.f32 0.0, %v364
        %366 = vmatprep.mubr.f32.mxu0 0.0
        %367 = vmatmul.mubr.f32.gmra.mxu0 %v223
        %v368 = vpop.f32.mrf.mxu0
        %v369 = vadd.f32 0.0, %v368
        %v370 = vpop.f32.mrf.mxu0
        %v371 = vadd.f32 0.0, %v370
        %372 = vmatprep.mubr.f32.mxu0 0.0
        %373 = vmatmul.mubr.f32.gmra.mxu0 %v224
        %v374 = vpop.f32.mrf.mxu0
        %v375 = vadd.f32 0.0, %v374
        %v376 = vpop.f32.mrf.mxu0
        %v377 = vadd.f32 0.0, %v376
        %378 = vmatprep.mubr.f32.mxu0 0.0
        %379 = vmatmul.mubr.f32.gmra.mxu0 %v225
        %v380 = vpop.f32.mrf.mxu0
        %v381 = vadd.f32 0.0, %v380
        %v382 = vpop.f32.mrf.mxu0
        %v383 = vadd.f32 0.0, %v382
        %384 = vmatprep.mubr.f32.mxu0 0.0
        %385 = vmatmul.mubr.f32.gmra.mxu0 %v226
        %v386 = vpop.f32.mrf.mxu0
        %v387 = vadd.f32 0.0, %v386
        %v388 = vpop.f32.mrf.mxu0
        %v389 = vadd.f32 0.0, %v388
        %390 = vmatprep.mubr.f32.mxu0 0.0
        %391 = vmatmul.mubr.f32.gmra.mxu0 %v227
        %v392 = vpop.f32.mrf.mxu0
        %v393 = vadd.f32 0.0, %v392
        %v394 = vpop.f32.mrf.mxu0
        %v395 = vadd.f32 0.0, %v394
        %396 = vmatprep.mubr.f32.mxu0 0.0
        %397 = vmatmul.mubr.f32.gmra.mxu0 %v228
        %v398 = vpop.f32.mrf.mxu0
        %v399 = vadd.f32 0.0, %v398
        %v400 = vpop.f32.mrf.mxu0
        %v401 = vadd.f32 0.0, %v400
        %402 = vmatprep.mubr.f32.mxu0 0.0
        %403 = vmatmul.mubr.f32.gmra.mxu0 %v229
        %v404 = vpop.f32.mrf.mxu0
        %v405 = vadd.f32 0.0, %v404
        %v406 = vpop.f32.mrf.mxu0
        %v407 = vadd.f32 0.0, %v406
        %408 = vmatprep.mubr.f32.mxu0 0.0
        %409 = vmatmul.mubr.f32.gmra.mxu0 %v230
        %v410 = vpop.f32.mrf.mxu0
        %v411 = vadd.f32 0.0, %v410
        %v412 = vpop.f32.mrf.mxu0
        %v413 = vadd.f32 0.0, %v412
        %414 = vmatprep.mubr.f32.mxu0 0.0
        %415 = vmatmul.mubr.f32.gmra.mxu0 %v231
        %v416 = vpop.f32.mrf.mxu0
        %v417 = vadd.f32 0.0, %v416
        %v418 = vpop.f32.mrf.mxu0
        %v419 = vadd.f32 0.0, %v418
        %420 = vmatprep.mubr.f32.mxu0 0.0
        %421 = vmatmul.mubr.f32.gmra.mxu0 %v232
        %v422 = vpop.f32.mrf.mxu0
        %v423 = vadd.f32 0.0, %v422
        %v424 = vpop.f32.mrf.mxu0
        %v425 = vadd.f32 0.0, %v424
        %426 = vmatprep.mubr.f32.mxu0 0.0
        %427 = vmatmul.mubr.f32.gmra.mxu0 %v233
        %v428 = vpop.f32.mrf.mxu0
        %v429 = vadd.f32 0.0, %v428
        %v430 = vpop.f32.mrf.mxu0
        %v431 = vadd.f32 0.0, %v430
        %432 = vmatprep.mubr.f32.mxu0 0.0
        %433 = vmatmul.mubr.f32.gmra.mxu0 %v234
        %v434 = vpop.f32.mrf.mxu0
        %v435 = vadd.f32 0.0, %v434
        %v436 = vpop.f32.mrf.mxu0
        %v437 = vadd.f32 0.0, %v436
        %438 = vmatprep.mubr.f32.mxu0 0.0
        %439 = vmatmul.mubr.f32.gmra.mxu0 %v235
        %v440 = vpop.f32.mrf.mxu0
        %v441 = vadd.f32 0.0, %v440
        %v442 = vpop.f32.mrf.mxu0
        %v443 = vadd.f32 0.0, %v442
        %444 = vmatprep.mubr.f32.mxu0 0.0
        %445 = vmatmul.mubr.f32.gmra.mxu0 %v236
        %v446 = vpop.f32.mrf.mxu0
        %v447 = vadd.f32 0.0, %v446
        %v448 = vpop.f32.mrf.mxu0
        %v449 = vadd.f32 0.0, %v448
        %450 = vmatprep.mubr.f32.mxu0 0.0
        %451 = vmatmul.mubr.f32.gmra.mxu0 %v237
        %v452 = vpop.f32.mrf.mxu0
        %v453 = vadd.f32 0.0, %v452
        %v454 = vpop.f32.mrf.mxu0
        %v455 = vadd.f32 0.0, %v454
        %456 = vmatprep.mubr.f32.mxu0 0.0
        %457 = vmatmul.mubr.f32.gmra.mxu0 %v238
        %v458 = vpop.f32.mrf.mxu0
        %v459 = vadd.f32 0.0, %v458
        %v460 = vpop.f32.mrf.mxu0
        %v461 = vadd.f32 0.0, %v460
        %462 = vmatprep.mubr.f32.mxu0 0.0
        %463 = vmatmul.mubr.f32.gmra.mxu0 %v239
        %v464 = vpop.f32.mrf.mxu0
        %v465 = vadd.f32 0.0, %v464
        %v466 = vpop.f32.mrf.mxu0
        %v467 = vadd.f32 0.0, %v466
        %468 = vmatprep.mubr.f32.mxu0 0.0
        %469 = vmatmul.mubr.f32.gmra.mxu0 %v240
        %v470 = vpop.f32.mrf.mxu0
        %v471 = vadd.f32 0.0, %v470
        %v472 = vpop.f32.mrf.mxu0
        %v473 = vadd.f32 0.0, %v472
        %474 = vmatprep.mubr.f32.mxu0 0.0
        %475 = vmatmul.mubr.f32.gmra.mxu0 %v241
        %v476 = vpop.f32.mrf.mxu0
        %v477 = vadd.f32 0.0, %v476
        %v478 = vpop.f32.mrf.mxu0
        %v479 = vadd.f32 0.0, %v478
        %480 = vmatprep.mubr.f32.mxu0 0.0
        %481 = vmatmul.mubr.f32.gmra.mxu0 %v242
        %v482 = vpop.f32.mrf.mxu0
        %v483 = vadd.f32 0.0, %v482
        %v484 = vpop.f32.mrf.mxu0
        %v485 = vadd.f32 0.0, %v484
        %486 = vmatprep.mubr.f32.mxu0 0.0
        %487 = vmatmul.mubr.f32.gmra.mxu0 %v243
        %v488 = vpop.f32.mrf.mxu0
        %v489 = vadd.f32 0.0, %v488
        %v490 = vpop.f32.mrf.mxu0
        %v491 = vadd.f32 0.0, %v490
        %492 = vmatprep.mubr.f32.mxu0 0.0
        %493 = vmatmul.mubr.f32.gmra.mxu0 %v244
        %v494 = vpop.f32.mrf.mxu0
        %v495 = vadd.f32 0.0, %v494
        %v496 = vpop.f32.mrf.mxu0
        %v497 = vadd.f32 0.0, %v496
        %498 = vmatprep.mubr.f32.mxu0 0.0
        %499 = vmatmul.mubr.f32.gmra.mxu0 %v245
        %v500 = vpop.f32.mrf.mxu0
        %v501 = vadd.f32 0.0, %v500
        %v502 = vpop.f32.mrf.mxu0
        %v503 = vadd.f32 0.0, %v502
        %504 = vmatprep.mubr.f32.mxu0 0.0
        %505 = vmatmul.mubr.f32.gmra.mxu0 %v246
        %v506 = vpop.f32.mrf.mxu0
        %v507 = vadd.f32 0.0, %v506
        %v508 = vpop.f32.mrf.mxu0
        %v509 = vadd.f32 0.0, %v508
        %510 = vmatprep.mubr.f32.mxu0 0.0
        %511 = vmatmul.mubr.f32.gmra.mxu0 %v247
        %v512 = vpop.f32.mrf.mxu0
        %v513 = vadd.f32 0.0, %v512
        %v514 = vpop.f32.mrf.mxu0
        %v515 = vadd.f32 0.0, %v514
        %516 = vmatprep.mubr.f32.mxu0 0.0
        %517 = vmatmul.mubr.f32.gmra.mxu0 %v248
        %v518 = vpop.f32.mrf.mxu0
        %v519 = vadd.f32 0.0, %v518
        %v520 = vpop.f32.mrf.mxu0
        %v521 = vadd.f32 0.0, %v520
        %522 = vmatprep.mubr.f32.mxu0 0.0
        %523 = vmatmul.mubr.f32.gmra.mxu0 %v249
        %v524 = vpop.f32.mrf.mxu0
        %v525 = vadd.f32 0.0, %v524
        %v526 = vpop.f32.mrf.mxu0
        %v527 = vadd.f32 0.0, %v526
        %528 = vmatprep.mubr.f32.mxu0 0.0
        %529 = vmatmul.mubr.f32.gmra.mxu0 %v250
        %v530 = vpop.f32.mrf.mxu0
        %v531 = vadd.f32 0.0, %v530
        %v532 = vpop.f32.mrf.mxu0
        %v533 = vadd.f32 0.0, %v532
        %534 = vmatprep.mubr.f32.mxu0 0.0
        %535 = vmatmul.mubr.f32.gmra.mxu0 %v251
        %v536 = vpop.f32.mrf.mxu0
        %v537 = vadd.f32 0.0, %v536
        %v538 = vpop.f32.mrf.mxu0
        %v539 = vadd.f32 0.0, %v538
        %540 = vdwg.mxu0
        %v541 = vxor.u32 %v353, 2147483648
        %v542 = vxor.u32 %v359, 2147483648
        %v543 = vxor.u32 %v365, 2147483648
        %v544 = vxor.u32 %v371, 2147483648
        %v545 = vxor.u32 %v377, 2147483648
        %v546 = vxor.u32 %v383, 2147483648
        %v547 = vxor.u32 %v389, 2147483648
        %v548 = vxor.u32 %v395, 2147483648
        %v549 = vxor.u32 %v401, 2147483648
        %v550 = vxor.u32 %v407, 2147483648
        %v551 = vxor.u32 %v413, 2147483648
        %v552 = vxor.u32 %v419, 2147483648
        %v553 = vxor.u32 %v425, 2147483648
        %v554 = vxor.u32 %v431, 2147483648
        %v555 = vxor.u32 %v437, 2147483648
        %v556 = vxor.u32 %v443, 2147483648
        %v557 = vxor.u32 %v449, 2147483648
        %v558 = vxor.u32 %v455, 2147483648
        %v559 = vxor.u32 %v461, 2147483648
        %v560 = vxor.u32 %v467, 2147483648
        %v561 = vxor.u32 %v473, 2147483648
        %v562 = vxor.u32 %v479, 2147483648
        %v563 = vxor.u32 %v485, 2147483648
        %v564 = vxor.u32 %v491, 2147483648
        %v565 = vxor.u32 %v497, 2147483648
        %v566 = vxor.u32 %v503, 2147483648
        %v567 = vxor.u32 %v509, 2147483648
        %v568 = vxor.u32 %v515, 2147483648
        %v569 = vxor.u32 %v521, 2147483648
        %v570 = vxor.u32 %v527, 2147483648
        %v571 = vxor.u32 %v533, 2147483648
        %v572 = vxor.u32 %v539, 2147483648
        %v573 = vmul.f32 %v541, 1.442695
        %v574 = vpow.pop %v573
        %v575 = vmul.f32 %v542, 1.442695
        %v576 = vpow.pop %v575
        %v577 = vmul.f32 %v543, 1.442695
        %v578 = vpow.pop %v577
        %v579 = vmul.f32 %v544, 1.442695
        %v580 = vpow.pop %v579
        %v581 = vmul.f32 %v545, 1.442695
        %v582 = vpow.pop %v581
        %v583 = vmul.f32 %v546, 1.442695
        %v584 = vpow.pop %v583
        %v585 = vmul.f32 %v547, 1.442695
        %v586 = vpow.pop %v585
        %v587 = vmul.f32 %v548, 1.442695
        %v588 = vpow.pop %v587
        %v589 = vmul.f32 %v549, 1.442695
        %v590 = vpow.pop %v589
        %v591 = vmul.f32 %v550, 1.442695
        %v592 = vpow.pop %v591
        %v593 = vmul.f32 %v551, 1.442695
        %v594 = vpow.pop %v593
        %v595 = vmul.f32 %v552, 1.442695
        %v596 = vpow.pop %v595
        %v597 = vmul.f32 %v553, 1.442695
        %v598 = vpow.pop %v597
        %v599 = vmul.f32 %v554, 1.442695
        %v600 = vpow.pop %v599
        %v601 = vmul.f32 %v555, 1.442695
        %v602 = vpow.pop %v601
        %v603 = vmul.f32 %v556, 1.442695
        %v604 = vpow.pop %v603
        %v605 = vmul.f32 %v557, 1.442695
        %v606 = vpow.pop %v605
        %v607 = vmul.f32 %v558, 1.442695
        %v608 = vpow.pop %v607
        %v609 = vmul.f32 %v559, 1.442695
        %v610 = vpow.pop %v609
        %v611 = vmul.f32 %v560, 1.442695
        %v612 = vpow.pop %v611
        %v613 = vmul.f32 %v561, 1.442695
        %v614 = vpow.pop %v613
        %v615 = vmul.f32 %v562, 1.442695
        %v616 = vpow.pop %v615
        %v617 = vmul.f32 %v563, 1.442695
        %v618 = vpow.pop %v617
        %v619 = vmul.f32 %v564, 1.442695
        %v620 = vpow.pop %v619
        %v621 = vmul.f32 %v565, 1.442695
        %v622 = vpow.pop %v621
        %v623 = vmul.f32 %v566, 1.442695
        %v624 = vpow.pop %v623
        %v625 = vmul.f32 %v567, 1.442695
        %v626 = vpow.pop %v625
        %v627 = vmul.f32 %v568, 1.442695
        %v628 = vpow.pop %v627
        %v629 = vmul.f32 %v569, 1.442695
        %v630 = vpow.pop %v629
        %v631 = vmul.f32 %v570, 1.442695
        %v632 = vpow.pop %v631
        %v633 = vmul.f32 %v571, 1.442695
        %v634 = vpow.pop %v633
        %v635 = vmul.f32 %v572, 1.442695
        %v636 = vpow.pop %v635
        %v637 = vadd.f32 %v574, 1.0
        %v638 = vadd.f32 %v576, 1.0
        %v639 = vadd.f32 %v578, 1.0
        %v640 = vadd.f32 %v580, 1.0
        %v641 = vadd.f32 %v582, 1.0
        %v642 = vadd.f32 %v584, 1.0
        %v643 = vadd.f32 %v586, 1.0
        %v644 = vadd.f32 %v588, 1.0
        %v645 = vadd.f32 %v590, 1.0
        %v646 = vadd.f32 %v592, 1.0
        %v647 = vadd.f32 %v594, 1.0
        %v648 = vadd.f32 %v596, 1.0
        %v649 = vadd.f32 %v598, 1.0
        %v650 = vadd.f32 %v600, 1.0
        %v651 = vadd.f32 %v602, 1.0
        %v652 = vadd.f32 %v604, 1.0
        %v653 = vadd.f32 %v606, 1.0
        %v654 = vadd.f32 %v608, 1.0
        %v655 = vadd.f32 %v610, 1.0
        %v656 = vadd.f32 %v612, 1.0
        %v657 = vadd.f32 %v614, 1.0
        %v658 = vadd.f32 %v616, 1.0
        %v659 = vadd.f32 %v618, 1.0
        %v660 = vadd.f32 %v620, 1.0
        %v661 = vadd.f32 %v622, 1.0
        %v662 = vadd.f32 %v624, 1.0
        %v663 = vadd.f32 %v626, 1.0
        %v664 = vadd.f32 %v628, 1.0
        %v665 = vadd.f32 %v630, 1.0
        %v666 = vadd.f32 %v632, 1.0
        %v667 = vadd.f32 %v634, 1.0
        %v668 = vadd.f32 %v636, 1.0
        %v669 = vrcp.pop %v637
        %v670 = vmul.f32 1.0, %v669
        %v671 = vrcp.pop %v638
        %v672 = vmul.f32 1.0, %v671
        %v673 = vrcp.pop %v639
        %v674 = vmul.f32 1.0, %v673
        %v675 = vrcp.pop %v640
        %v676 = vmul.f32 1.0, %v675
        %v677 = vrcp.pop %v641
        %v678 = vmul.f32 1.0, %v677
        %v679 = vrcp.pop %v642
        %v680 = vmul.f32 1.0, %v679
        %v681 = vrcp.pop %v643
        %v682 = vmul.f32 1.0, %v681
        %v683 = vrcp.pop %v644
        %v684 = vmul.f32 1.0, %v683
        %v685 = vrcp.pop %v645
        %v686 = vmul.f32 1.0, %v685
        %v687 = vrcp.pop %v646
        %v688 = vmul.f32 1.0, %v687
        %v689 = vrcp.pop %v647
        %v690 = vmul.f32 1.0, %v689
        %v691 = vrcp.pop %v648
        %v692 = vmul.f32 1.0, %v691
        %v693 = vrcp.pop %v649
        %v694 = vmul.f32 1.0, %v693
        %v695 = vrcp.pop %v650
        %v696 = vmul.f32 1.0, %v695
        %v697 = vrcp.pop %v651
        %v698 = vmul.f32 1.0, %v697
        %v699 = vrcp.pop %v652
        %v700 = vmul.f32 1.0, %v699
        %v701 = vrcp.pop %v653
        %v702 = vmul.f32 1.0, %v701
        %v703 = vrcp.pop %v654
        %v704 = vmul.f32 1.0, %v703
        %v705 = vrcp.pop %v655
        %v706 = vmul.f32 1.0, %v705
        %v707 = vrcp.pop %v656
        %v708 = vmul.f32 1.0, %v707
        %v709 = vrcp.pop %v657
        %v710 = vmul.f32 1.0, %v709
        %v711 = vrcp.pop %v658
        %v712 = vmul.f32 1.0, %v711
        %v713 = vrcp.pop %v659
        %v714 = vmul.f32 1.0, %v713
        %v715 = vrcp.pop %v660
        %v716 = vmul.f32 1.0, %v715
        %v717 = vrcp.pop %v661
        %v718 = vmul.f32 1.0, %v717
        %v719 = vrcp.pop %v662
        %v720 = vmul.f32 1.0, %v719
        %v721 = vrcp.pop %v663
        %v722 = vmul.f32 1.0, %v721
        %v723 = vrcp.pop %v664
        %v724 = vmul.f32 1.0, %v723
        %v725 = vrcp.pop %v665
        %v726 = vmul.f32 1.0, %v725
        %v727 = vrcp.pop %v666
        %v728 = vmul.f32 1.0, %v727
        %v729 = vrcp.pop %v667
        %v730 = vmul.f32 1.0, %v729
        %v731 = vrcp.pop %v668
        %v732 = vmul.f32 1.0, %v731
        %v733 = vmul.f32 %v353, %v670
        %v734 = vmul.f32 %v359, %v672
        %v735 = vmul.f32 %v365, %v674
        %v736 = vmul.f32 %v371, %v676
        %v737 = vmul.f32 %v377, %v678
        %v738 = vmul.f32 %v383, %v680
        %v739 = vmul.f32 %v389, %v682
        %v740 = vmul.f32 %v395, %v684
        %v741 = vmul.f32 %v401, %v686
        %v742 = vmul.f32 %v407, %v688
        %v743 = vmul.f32 %v413, %v690
        %v744 = vmul.f32 %v419, %v692
        %v745 = vmul.f32 %v425, %v694
        %v746 = vmul.f32 %v431, %v696
        %v747 = vmul.f32 %v437, %v698
        %v748 = vmul.f32 %v443, %v700
        %v749 = vmul.f32 %v449, %v702
        %v750 = vmul.f32 %v455, %v704
        %v751 = vmul.f32 %v461, %v706
        %v752 = vmul.f32 %v467, %v708
        %v753 = vmul.f32 %v473, %v710
        %v754 = vmul.f32 %v479, %v712
        %v755 = vmul.f32 %v485, %v714
        %v756 = vmul.f32 %v491, %v716
        %v757 = vmul.f32 %v497, %v718
        %v758 = vmul.f32 %v503, %v720
        %v759 = vmul.f32 %v509, %v722
        %v760 = vmul.f32 %v515, %v724
        %v761 = vmul.f32 %v521, %v726
        %v762 = vmul.f32 %v527, %v728
        %v763 = vmul.f32 %v533, %v730
        %v764 = vmul.f32 %v539, %v732
        %v765 = vmul.f32 %v351, %v733
        %v766 = vmul.f32 %v357, %v734
        %v767 = vmul.f32 %v363, %v735
        %v768 = vmul.f32 %v369, %v736
        %v769 = vmul.f32 %v375, %v737
        %v770 = vmul.f32 %v381, %v738
        %v771 = vmul.f32 %v387, %v739
        %v772 = vmul.f32 %v393, %v740
        %v773 = vmul.f32 %v399, %v741
        %v774 = vmul.f32 %v405, %v742
        %v775 = vmul.f32 %v411, %v743
        %v776 = vmul.f32 %v417, %v744
        %v777 = vmul.f32 %v423, %v745
        %v778 = vmul.f32 %v429, %v746
        %v779 = vmul.f32 %v435, %v747
        %v780 = vmul.f32 %v441, %v748
        %v781 = vmul.f32 %v447, %v749
        %v782 = vmul.f32 %v453, %v750
        %v783 = vmul.f32 %v459, %v751
        %v784 = vmul.f32 %v465, %v752
        %v785 = vmul.f32 %v471, %v753
        %v786 = vmul.f32 %v477, %v754
        %v787 = vmul.f32 %v483, %v755
        %v788 = vmul.f32 %v489, %v756
        %v789 = vmul.f32 %v495, %v757
        %v790 = vmul.f32 %v501, %v758
        %v791 = vmul.f32 %v507, %v759
        %v792 = vmul.f32 %v513, %v760
        %v793 = vmul.f32 %v519, %v761
        %v794 = vmul.f32 %v525, %v762
        %v795 = vmul.f32 %v531, %v763
        %v796 = vmul.f32 %v537, %v764
        %v797 = vld [vmem:[#allocation7] sm:$0xff]
        %v798 = vld [vmem:[#allocation7 + $0x8] sm:$0xff]
        %v799 = vld [vmem:[#allocation7 + $0x10] sm:$0xff]
        %v800 = vld [vmem:[#allocation7 + $0x18] sm:$0xff]
        %v801 = vld [vmem:[#allocation7 + $0x20] sm:$0xff]
        %v802 = vld [vmem:[#allocation7 + $0x28] sm:$0xff]
        %v803 = vld [vmem:[#allocation7 + $0x30] sm:$0xff]
        %v804 = vld [vmem:[#allocation7 + $0x38] sm:$0xff]
        %v805 = vld [vmem:[#allocation7 + $0x40] sm:$0xff]
        %v806 = vld [vmem:[#allocation7 + $0x48] sm:$0xff]
        %v807 = vld [vmem:[#allocation7 + $0x50] sm:$0xff]
        %v808 = vld [vmem:[#allocation7 + $0x58] sm:$0xff]
        %v809 = vld [vmem:[#allocation7 + $0x60] sm:$0xff]
        %v810 = vld [vmem:[#allocation7 + $0x68] sm:$0xff]
        %v811 = vld [vmem:[#allocation7 + $0x70] sm:$0xff]
        %v812 = vld [vmem:[#allocation7 + $0x78] sm:$0xff]
        %813 = vmatprep.subr.mxu0 0.0
        %814 = vmatpush1.msra.mxu0 %v812
        %815 = vmatprep.subr.mxu0 0.0
        %816 = vmatpush1.msra.mxu0 %v811
        %817 = vmatprep.subr.mxu0 0.0
        %818 = vmatpush1.msra.mxu0 %v810
        %819 = vmatprep.subr.mxu0 0.0
        %820 = vmatpush1.msra.mxu0 %v809
        %821 = vmatprep.subr.mxu0 0.0
        %822 = vmatpush1.msra.mxu0 %v808
        %823 = vmatprep.subr.mxu0 0.0
        %824 = vmatpush1.msra.mxu0 %v807
        %825 = vmatprep.subr.mxu0 0.0
        %826 = vmatpush1.msra.mxu0 %v806
        %827 = vmatprep.subr.mxu0 0.0
        %828 = vmatpush1.msra.mxu0 %v805
        %829 = vmatprep.subr.mxu0 0.0
        %830 = vmatpush1.msra.mxu0 %v804
        %831 = vmatprep.subr.mxu0 0.0
        %832 = vmatpush1.msra.mxu0 %v803
        %833 = vmatprep.subr.mxu0 0.0
        %834 = vmatpush1.msra.mxu0 %v802
        %835 = vmatprep.subr.mxu0 0.0
        %836 = vmatpush1.msra.mxu0 %v801
        %837 = vmatprep.subr.mxu0 0.0
        %838 = vmatpush1.msra.mxu0 %v800
        %839 = vmatprep.subr.mxu0 0.0
        %840 = vmatpush1.msra.mxu0 %v799
        %841 = vmatprep.subr.mxu0 0.0
        %842 = vmatpush1.msra.mxu0 %v798
        %843 = vmatprep.subr.mxu0 0.0
        %844 = vmatpush1.msra.mxu0 %v797
        %845 = vmatprep.subr.mxu0 0.0
        %846 = vmatpush2.msra.mxu0 0.0
        %847 = vmatprep.subr.mxu0 0.0
        %848 = vmatpush2.msra.mxu0 0.0
        %849 = vmatprep.subr.mxu0 0.0
        %850 = vmatpush2.msra.mxu0 0.0
        %851 = vmatprep.subr.mxu0 0.0
        %852 = vmatpush2.msra.mxu0 0.0
        %853 = vmatprep.subr.mxu0 0.0
        %854 = vmatpush2.msra.mxu0 0.0
        %855 = vmatprep.subr.mxu0 0.0
        %856 = vmatpush2.msra.mxu0 0.0
        %857 = vmatprep.subr.mxu0 0.0
        %858 = vmatpush2.msra.mxu0 0.0
        %859 = vmatprep.subr.mxu0 0.0
        %860 = vmatpush2.msra.mxu0 0.0
        %861 = vmatprep.subr.mxu0 0.0
        %862 = vmatpush2.msra.mxu0 0.0
        %863 = vmatprep.subr.mxu0 0.0
        %864 = vmatpush2.msra.mxu0 0.0
        %865 = vmatprep.subr.mxu0 0.0
        %866 = vmatpush2.msra.mxu0 0.0
        %867 = vmatprep.subr.mxu0 0.0
        %868 = vmatpush2.msra.mxu0 0.0
        %869 = vmatprep.subr.mxu0 0.0
        %870 = vmatpush2.msra.mxu0 0.0
        %871 = vmatprep.subr.mxu0 0.0
        %872 = vmatpush2.msra.mxu0 0.0
        %873 = vmatprep.subr.mxu0 0.0
        %874 = vmatpush2.msra.mxu0 0.0
        %875 = vmatprep.subr.mxu0 0.0
        %876 = vmatpush2.msra.mxu0 0.0
        %877 = vmatprep.mubr.f32.mxu0 0.0
        %878 = vmatmul.mubr.f32.gmra.mxu0 %v765
        %v879 = vpop.f32.mrf.mxu0
        %v880 = vadd.f32 0.0, %v879
        %v881 = vpop.f32.mrf.mxu0
        %882 = vmatprep.mubr.f32.mxu0 0.0
        %883 = vmatmul.mubr.f32.gmra.mxu0 %v766
        %v884 = vpop.f32.mrf.mxu0
        %v885 = vadd.f32 0.0, %v884
        %v886 = vpop.f32.mrf.mxu0
        %887 = vmatprep.mubr.f32.mxu0 0.0
        %888 = vmatmul.mubr.f32.gmra.mxu0 %v767
        %v889 = vpop.f32.mrf.mxu0
        %v890 = vadd.f32 0.0, %v889
        %v891 = vpop.f32.mrf.mxu0
        %892 = vmatprep.mubr.f32.mxu0 0.0
        %893 = vmatmul.mubr.f32.gmra.mxu0 %v768
        %v894 = vpop.f32.mrf.mxu0
        %v895 = vadd.f32 0.0, %v894
        %v896 = vpop.f32.mrf.mxu0
        %897 = vmatprep.mubr.f32.mxu0 0.0
        %898 = vmatmul.mubr.f32.gmra.mxu0 %v769
        %v899 = vpop.f32.mrf.mxu0
        %v900 = vadd.f32 0.0, %v899
        %v901 = vpop.f32.mrf.mxu0
        %902 = vmatprep.mubr.f32.mxu0 0.0
        %903 = vmatmul.mubr.f32.gmra.mxu0 %v770
        %v904 = vpop.f32.mrf.mxu0
        %v905 = vadd.f32 0.0, %v904
        %v906 = vpop.f32.mrf.mxu0
        %907 = vmatprep.mubr.f32.mxu0 0.0
        %908 = vmatmul.mubr.f32.gmra.mxu0 %v771
        %v909 = vpop.f32.mrf.mxu0
        %v910 = vadd.f32 0.0, %v909
        %v911 = vpop.f32.mrf.mxu0
        %912 = vmatprep.mubr.f32.mxu0 0.0
        %913 = vmatmul.mubr.f32.gmra.mxu0 %v772
        %v914 = vpop.f32.mrf.mxu0
        %v915 = vadd.f32 0.0, %v914
        %v916 = vpop.f32.mrf.mxu0
        %917 = vmatprep.mubr.f32.mxu0 0.0
        %918 = vmatmul.mubr.f32.gmra.mxu0 %v773
        %v919 = vpop.f32.mrf.mxu0
        %v920 = vadd.f32 0.0, %v919
        %v921 = vpop.f32.mrf.mxu0
        %922 = vmatprep.mubr.f32.mxu0 0.0
        %923 = vmatmul.mubr.f32.gmra.mxu0 %v774
        %v924 = vpop.f32.mrf.mxu0
        %v925 = vadd.f32 0.0, %v924
        %v926 = vpop.f32.mrf.mxu0
        %927 = vmatprep.mubr.f32.mxu0 0.0
        %928 = vmatmul.mubr.f32.gmra.mxu0 %v775
        %v929 = vpop.f32.mrf.mxu0
        %v930 = vadd.f32 0.0, %v929
        %v931 = vpop.f32.mrf.mxu0
        %932 = vmatprep.mubr.f32.mxu0 0.0
        %933 = vmatmul.mubr.f32.gmra.mxu0 %v776
        %v934 = vpop.f32.mrf.mxu0
        %v935 = vadd.f32 0.0, %v934
        %v936 = vpop.f32.mrf.mxu0
        %937 = vmatprep.mubr.f32.mxu0 0.0
        %938 = vmatmul.mubr.f32.gmra.mxu0 %v777
        %v939 = vpop.f32.mrf.mxu0
        %v940 = vadd.f32 0.0, %v939
        %v941 = vpop.f32.mrf.mxu0
        %942 = vmatprep.mubr.f32.mxu0 0.0
        %943 = vmatmul.mubr.f32.gmra.mxu0 %v778
        %v944 = vpop.f32.mrf.mxu0
        %v945 = vadd.f32 0.0, %v944
        %v946 = vpop.f32.mrf.mxu0
        %947 = vmatprep.mubr.f32.mxu0 0.0
        %948 = vmatmul.mubr.f32.gmra.mxu0 %v779
        %v949 = vpop.f32.mrf.mxu0
        %v950 = vadd.f32 0.0, %v949
        %v951 = vpop.f32.mrf.mxu0
        %952 = vmatprep.mubr.f32.mxu0 0.0
        %953 = vmatmul.mubr.f32.gmra.mxu0 %v780
        %v954 = vpop.f32.mrf.mxu0
        %v955 = vadd.f32 0.0, %v954
        %v956 = vpop.f32.mrf.mxu0
        %957 = vmatprep.mubr.f32.mxu0 0.0
        %958 = vmatmul.mubr.f32.gmra.mxu0 %v781
        %v959 = vpop.f32.mrf.mxu0
        %v960 = vadd.f32 0.0, %v959
        %v961 = vpop.f32.mrf.mxu0
        %962 = vmatprep.mubr.f32.mxu0 0.0
        %963 = vmatmul.mubr.f32.gmra.mxu0 %v782
        %v964 = vpop.f32.mrf.mxu0
        %v965 = vadd.f32 0.0, %v964
        %v966 = vpop.f32.mrf.mxu0
        %967 = vmatprep.mubr.f32.mxu0 0.0
        %968 = vmatmul.mubr.f32.gmra.mxu0 %v783
        %v969 = vpop.f32.mrf.mxu0
        %v970 = vadd.f32 0.0, %v969
        %v971 = vpop.f32.mrf.mxu0
        %972 = vmatprep.mubr.f32.mxu0 0.0
        %973 = vmatmul.mubr.f32.gmra.mxu0 %v784
        %v974 = vpop.f32.mrf.mxu0
        %v975 = vadd.f32 0.0, %v974
        %v976 = vpop.f32.mrf.mxu0
        %977 = vmatprep.mubr.f32.mxu0 0.0
        %978 = vmatmul.mubr.f32.gmra.mxu0 %v785
        %v979 = vpop.f32.mrf.mxu0
        %v980 = vadd.f32 0.0, %v979
        %v981 = vpop.f32.mrf.mxu0
        %982 = vmatprep.mubr.f32.mxu0 0.0
        %983 = vmatmul.mubr.f32.gmra.mxu0 %v786
        %v984 = vpop.f32.mrf.mxu0
        %v985 = vadd.f32 0.0, %v984
        %v986 = vpop.f32.mrf.mxu0
        %987 = vmatprep.mubr.f32.mxu0 0.0
        %988 = vmatmul.mubr.f32.gmra.mxu0 %v787
        %v989 = vpop.f32.mrf.mxu0
        %v990 = vadd.f32 0.0, %v989
        %v991 = vpop.f32.mrf.mxu0
        %992 = vmatprep.mubr.f32.mxu0 0.0
        %993 = vmatmul.mubr.f32.gmra.mxu0 %v788
        %v994 = vpop.f32.mrf.mxu0
        %v995 = vadd.f32 0.0, %v994
        %v996 = vpop.f32.mrf.mxu0
        %997 = vmatprep.mubr.f32.mxu0 0.0
        %998 = vmatmul.mubr.f32.gmra.mxu0 %v789
        %v999 = vpop.f32.mrf.mxu0
        %v1000 = vadd.f32 0.0, %v999
        %v1001 = vpop.f32.mrf.mxu0
        %1002 = vmatprep.mubr.f32.mxu0 0.0
        %1003 = vmatmul.mubr.f32.gmra.mxu0 %v790
        %v1004 = vpop.f32.mrf.mxu0
        %v1005 = vadd.f32 0.0, %v1004
        %v1006 = vpop.f32.mrf.mxu0
        %1007 = vmatprep.mubr.f32.mxu0 0.0
        %1008 = vmatmul.mubr.f32.gmra.mxu0 %v791
        %v1009 = vpop.f32.mrf.mxu0
        %v1010 = vadd.f32 0.0, %v1009
        %v1011 = vpop.f32.mrf.mxu0
        %1012 = vmatprep.mubr.f32.mxu0 0.0
        %1013 = vmatmul.mubr.f32.gmra.mxu0 %v792
        %v1014 = vpop.f32.mrf.mxu0
        %v1015 = vadd.f32 0.0, %v1014
        %v1016 = vpop.f32.mrf.mxu0
        %1017 = vmatprep.mubr.f32.mxu0 0.0
        %1018 = vmatmul.mubr.f32.gmra.mxu0 %v793
        %v1019 = vpop.f32.mrf.mxu0
        %v1020 = vadd.f32 0.0, %v1019
        %v1021 = vpop.f32.mrf.mxu0
        %1022 = vmatprep.mubr.f32.mxu0 0.0
        %1023 = vmatmul.mubr.f32.gmra.mxu0 %v794
        %v1024 = vpop.f32.mrf.mxu0
        %v1025 = vadd.f32 0.0, %v1024
        %v1026 = vpop.f32.mrf.mxu0
        %1027 = vmatprep.mubr.f32.mxu0 0.0
        %1028 = vmatmul.mubr.f32.gmra.mxu0 %v795
        %v1029 = vpop.f32.mrf.mxu0
        %v1030 = vadd.f32 0.0, %v1029
        %v1031 = vpop.f32.mrf.mxu0
        %1032 = vmatprep.mubr.f32.mxu0 0.0
        %1033 = vmatmul.mubr.f32.gmra.mxu0 %v796
        %v1034 = vpop.f32.mrf.mxu0
        %v1035 = vadd.f32 0.0, %v1034
        %v1036 = vpop.f32.mrf.mxu0
        %1037 = vdwg.mxu0
        %1038 = vst [vmem:[%s217] sm:$0xff] %v880
        %1039 = vst [vmem:[%s217 + $0x8] sm:$0xff] %v885
        %1040 = vst [vmem:[%s217 + $0x10] sm:$0xff] %v890
        %1041 = vst [vmem:[%s217 + $0x18] sm:$0xff] %v895
        %1042 = vst [vmem:[%s217 + $0x20] sm:$0xff] %v900
        %1043 = vst [vmem:[%s217 + $0x28] sm:$0xff] %v905
        %1044 = vst [vmem:[%s217 + $0x30] sm:$0xff] %v910
        %1045 = vst [vmem:[%s217 + $0x38] sm:$0xff] %v915
        %1046 = vst [vmem:[%s217 + $0x40] sm:$0xff] %v920
        %1047 = vst [vmem:[%s217 + $0x48] sm:$0xff] %v925
        %1048 = vst [vmem:[%s217 + $0x50] sm:$0xff] %v930
        %1049 = vst [vmem:[%s217 + $0x58] sm:$0xff] %v935
        %1050 = vst [vmem:[%s217 + $0x60] sm:$0xff] %v940
        %1051 = vst [vmem:[%s217 + $0x68] sm:$0xff] %v945
        %1052 = vst [vmem:[%s217 + $0x70] sm:$0xff] %v950
        %1053 = vst [vmem:[%s217 + $0x78] sm:$0xff] %v955
        %1054 = vst [vmem:[%s217 + $0x80] sm:$0xff] %v960
        %1055 = vst [vmem:[%s217 + $0x88] sm:$0xff] %v965
        %1056 = vst [vmem:[%s217 + $0x90] sm:$0xff] %v970
        %1057 = vst [vmem:[%s217 + $0x98] sm:$0xff] %v975
        %1058 = vst [vmem:[%s217 + $0xa0] sm:$0xff] %v980
        %1059 = vst [vmem:[%s217 + $0xa8] sm:$0xff] %v985
        %1060 = vst [vmem:[%s217 + $0xb0] sm:$0xff] %v990
        %1061 = vst [vmem:[%s217 + $0xb8] sm:$0xff] %v995
        %1062 = vst [vmem:[%s217 + $0xc0] sm:$0xff] %v1000
        %1063 = vst [vmem:[%s217 + $0xc8] sm:$0xff] %v1005
        %1064 = vst [vmem:[%s217 + $0xd0] sm:$0xff] %v1010
        %1065 = vst [vmem:[%s217 + $0xd8] sm:$0xff] %v1015
        %1066 = vst [vmem:[%s217 + $0xe0] sm:$0xff] %v1020
        %1067 = vst [vmem:[%s217 + $0xe8] sm:$0xff] %v1025
        %1068 = vst [vmem:[%s217 + $0xf0] sm:$0xff] %v1030
        %1069 = vst [vmem:[%s217 + $0xf8] sm:$0xff] %v1035
        %s1070 = sand.u32 %s97, 1
        %s1071 = scalar_lea.sflag [#allocation4], %s1070
        %s1072 = sand.u32 %s97, 1
        %s1073 = smul.addr %s1072, 256
        %s1074 = scalar_lea.vmem [#allocation8], %s1073
        // Predicated region
        $region45: #{tpu_custom_call.1} parent=31 // pred_check
          %p1075 = pneg %p107
        $region46: #{tpu_custom_call.1} parent=31 // pred_check_branch
          %1077 = sbr.rel (%p1075) target = $region48
        $region47: #{tpu_custom_call.1} parent=31 // pred_region
          %s1078 = smul.u32 32, %s21
          %s1080 = ssub.s32 4096, 4096
          %1081 = vsyncadd %s1071, %s1080
          %s1082 = smul.addr %s1078, 128
          %s1083 = scalar_lea.hbm %s3, %s1082
          %s1084 = sshll.u32 %s1074, 4
          %s1085 = int_to_ptr.vmem [resolvable:$true] %s1084
          %1090 = dma.vmem_to_hbm [thread:$0]  %s1085, 4096, %s1083, %s1071, 128, 128, 8
        $region48: #{tpu_custom_call.1} parent=31 // pred_fallthru
          _
      $region32: #{tpu_custom_call.1} parent=5 // pred_fallthru
        _
      %p1091 = scmp.le.s32.totalorder 2, %s16
      // Predicated region
      $region49: #{tpu_custom_call.1} parent=5 // pred_check
        %p1092 = pneg %p1091
      $region50: #{tpu_custom_call.1} parent=5 // pred_check_branch
        %1094 = sbr.rel (%p1092) target = $region52
      $region51: #{tpu_custom_call.1} parent=5 // pred_region
        %s1095 = ssub.s32 %s16, 2
        // Predicated region
        $region53: #{tpu_custom_call.1} parent=51 // pred_check
          %p1096 = pneg %p113
        $region54: #{tpu_custom_call.1} parent=51 // pred_check_branch
          %1098 = sbr.rel (%p1096) target = $region56
        $region55: #{tpu_custom_call.1} parent=51 // pred_region
          %s1099 = sand.u32 %s98, 1
          %s1100 = scalar_lea.sflag [#allocation4], %s1099
          %s1101 = sand.u32 %s98, 1
          %s1102 = smul.addr %s1101, 256
          %s1103 = scalar_lea.vmem [#allocation8], %s1102
          %1104 = dma.done %s1100, 4096
        $region56: #{tpu_custom_call.1} parent=51 // pred_fallthru
          _
      $region52: #{tpu_custom_call.1} parent=5 // pred_fallthru
        _
    $region6: #{tpu_custom_call.1} parent=1 // loop_footer
      %s20 = sadd.s32 1, %s16
    $region7: #{tpu_custom_call.1} parent=1 // loop_footer_branch
      %15 = sbr.rel target = $region3
    $region8: #{tpu_custom_call.1} parent=1 // loop_exit
      _
    %1105 = vsyncpa [#allocation3], 1
    %s1106 = scalar_lea.sflag [#allocation3], 1
    %1107 = vsyncpa %s1106, 1
    %1108 = vsyncpa [#allocation6], 1
    %1109 = vsyncpa [#allocation4], 1
    %s1110 = scalar_lea.sflag [#allocation4], 1
    %1111 = vsyncpa %s1110, 1

</llo_original>
